<compile_context>
chip_gen: v7x
topology: tpu7x:2x2x1
jax: 0.10.0
libtpu: 0.0.40
codegen_flags: <defaults>
</compile_context>

<pallas_src>
import functools

import jax
import jax.numpy as jnp
from jax.experimental import pallas as pl
from jax.experimental.pallas import tpu as pltpu

IGNORE_LABEL = 255
TAU = 50.0
EPS = 1e-12  # F.normalize eps


def _proto_loss_kernel(proto_ref, feat_ref, labels_ref, sum_ref, cnt_ref, proto_sc):
    j = pl.program_id(1)  # inner ("arbitrary") reduction axis

    @pl.when(j == 0)
    def _():
        # Normalize prototypes once per core slice; reuse every iteration.
        p = proto_ref[...].astype(jnp.float32)                       # (C, A)
        p_sq = jnp.sum(p * p, axis=1, keepdims=True)
        proto_sc[...] = p * jax.lax.rsqrt(jnp.maximum(p_sq, EPS * EPS))
        # Output blocks double as per-core accumulators (resident across j).
        sum_ref[...] = jnp.zeros_like(sum_ref)
        cnt_ref[...] = jnp.zeros_like(cnt_ref)

    feat = feat_ref[...].astype(jnp.float32)                         # (TN, A)
    labels = labels_ref[...]                                         # (1, TN) int32

    # L2-normalize feat rows: rsqrt(max(||x||^2, eps^2)) == 1/max(||x||, eps)
    f_sq = jnp.sum(feat * feat, axis=1, keepdims=True)               # (TN, 1)
    feat_n = feat * jax.lax.rsqrt(jnp.maximum(f_sq, EPS * EPS))

    # Cosine logits in transposed (C, TN) layout -> lane-dense N dimension,
    # no materialized transpose (same contraction pattern as flash-attn QK^T).
    logits = jax.lax.dot_general(
        proto_sc[...], feat_n,
        dimension_numbers=(((1,), (1,)), ((), ())),
        preferred_element_type=jnp.float32,
    ) * (1.0 / TAU)                                                  # (C, TN)

    # Per-column cross entropy: logsumexp over classes - logits[label, col]
    m = jnp.max(logits, axis=0, keepdims=True)                       # (1, TN)
    lse = m + jnp.log(jnp.sum(jnp.exp(logits - m), axis=0, keepdims=True))

    cls = jax.lax.broadcasted_iota(jnp.int32, logits.shape, 0)       # (C, TN)
    onehot = (cls == labels).astype(jnp.float32)   # label==255 -> all-zero col
    picked = jnp.sum(logits * onehot, axis=0, keepdims=True)         # (1, TN)

    valid = (labels != IGNORE_LABEL).astype(jnp.float32)             # (1, TN)
    per_col = (lse - picked) * valid                                 # (1, TN)

    tn = labels.shape[1]
    sum_ref[...] += per_col.reshape(1, 1, tn)
    cnt_ref[...] += valid.reshape(1, 1, tn)


@functools.partial(jax.jit, static_argnames=("tile_n", "max_cores"))
def prototype_contrastive_loss(proto, feat, labels, *, tile_n=512, max_cores=2):
    """proto: (C, A), feat: (N, A) f32/bf16, labels: (N,) int -> scalar f32 loss."""
    C, A = proto.shape
    N = feat.shape[0]

    # Split rows across TensorCores only when there is enough work.
    n_cores = max(1, min(max_cores, -(-N // tile_n)))

    # Pad rows so the grid divides evenly across tiles and cores; padded rows
    # carry the ignore label and contribute nothing to the loss.
    chunk = tile_n * n_cores
    n_pad = (-N) % chunk
    labels = labels.astype(jnp.int32)
    if n_pad:
        feat = jnp.pad(feat, ((0, n_pad), (0, 0)))
        labels = jnp.concatenate(
            [labels, jnp.full((n_pad,), IGNORE_LABEL, jnp.int32)], axis=0
        )
    n_total = N + n_pad
    labels_row = labels.reshape(1, n_total)          # lane-dense labels

    n_tiles = n_total // tile_n
    n_inner = n_tiles // n_cores
    grid = (n_cores, n_inner)

    sums, cnts = pl.pallas_call(
        _proto_loss_kernel,
        out_shape=(
            jax.ShapeDtypeStruct((n_cores, 1, tile_n), jnp.float32),
            jax.ShapeDtypeStruct((n_cores, 1, tile_n), jnp.float32),
        ),
        grid_spec=pltpu.PrefetchScalarGridSpec(
            num_scalar_prefetch=0,
            grid=grid,
            in_specs=[
                pl.BlockSpec((C, A), lambda i, j: (0, 0)),                 # Proto (full)
                pl.BlockSpec((tile_n, A),
                             lambda i, j: (i * n_inner + j, 0)),           # feat tile
                pl.BlockSpec((1, tile_n),
                             lambda i, j: (0, i * n_inner + j)),           # labels row
            ],
            out_specs=(
                pl.BlockSpec((1, 1, tile_n), lambda i, j: (i, 0, 0)),      # per-core loss sum
                pl.BlockSpec((1, 1, tile_n), lambda i, j: (i, 0, 0)),      # per-core valid count
            ),
            scratch_shapes=[
                pltpu.VMEM((C, A), jnp.float32),     # normalized prototypes
            ],
        ),
        compiler_params=pltpu.CompilerParams(
            dimension_semantics=("parallel", "arbitrary"),
        ),
    )(proto, feat, labels_row)

    # 0/0 -> NaN, matching torch CrossEntropyLoss when no valid targets exist.
    return jnp.sum(sums) / jnp.sum(cnts)


def _reference_loss(proto, feat, labels):
    """Pure-JAX reference matching the PyTorch module."""
    mask = labels != IGNORE_LABEL
    feat = feat.astype(jnp.float32)
    proto = proto.astype(jnp.float32)
    feat_n = feat / jnp.maximum(jnp.linalg.norm(feat, axis=1, keepdims=True), EPS)
    proto_n = proto / jnp.maximum(jnp.linalg.norm(proto, axis=1, keepdims=True), EPS)
    logits = (feat_n @ proto_n.T) / TAU
    lse = jax.nn.logsumexp(logits, axis=1)
    picked = jnp.take_along_axis(
        logits, jnp.clip(labels, 0, proto.shape[0] - 1)[:, None], axis=1
    )[:, 0]
    per_row = (lse - picked) * mask.astype(jnp.float32)
    return jnp.sum(per_row) / jnp.sum(mask.astype(jnp.float32))


if __name__ == "__main__":
    # Synthetic shapes implied by the module: B=2, H=W=16 -> N = BHW = 512,
    # feat_dim A = 32, NUM_CLASSES C = 8.
    B, H, W = 2, 16, 16
    N = B * H * W
    A = 32
    C = 8

    key = jax.random.PRNGKey(0)
    k_proto, k_feat, k_lab, k_ign = jax.random.split(key, 4)

    proto = jax.random.normal(k_proto, (C, A), dtype=jnp.float32)
    feat = jax.random.normal(k_feat, (N, A), dtype=jnp.float32)
    labels = jax.random.randint(k_lab, (N,), 0, C, dtype=jnp.int32)
    # sprinkle in some ignore labels (255)
    ignore_mask = jax.random.bernoulli(k_ign, 0.2, (N,))
    labels = jnp.where(ignore_mask, jnp.int32(IGNORE_LABEL), labels)

    loss = jax.block_until_ready(prototype_contrastive_loss(proto, feat, labels))
    ref = jax.block_until_ready(_reference_loss(proto, feat, labels))
    assert jnp.allclose(loss, ref, rtol=1e-4, atol=1e-5), (loss, ref)

    # Second case: N not a multiple of tile_n (exercises row padding and the
    # two-core grid path).
    N2 = 700
    k_feat2, k_lab2, k_ign2 = jax.random.split(jax.random.PRNGKey(1), 3)
    feat2 = jax.random.normal(k_feat2, (N2, A), dtype=jnp.float32)
    labels2 = jax.random.randint(k_lab2, (N2,), 0, C, dtype=jnp.int32)
    labels2 = jnp.where(
        jax.random.bernoulli(k_ign2, 0.3, (N2,)), jnp.int32(IGNORE_LABEL), labels2
    )
    loss2 = jax.block_until_ready(prototype_contrastive_loss(proto, feat2, labels2))
    ref2 = jax.block_until_ready(_reference_loss(proto, feat2, labels2))
    assert jnp.allclose(loss2, ref2, rtol=1e-4, atol=1e-5), (loss2, ref2)

    print("KERNEL_OK")
</pallas_src>

<mosaic_0001>
module attributes {stable_mosaic.version = 11 : i64} {
  func.func @_proto_loss_kernel(%arg0: i32, %arg1: i32, %arg2: memref<8x32xf32, #tpu.memory_space<vmem>>, %arg3: memref<512x32xf32, #tpu.memory_space<vmem>>, %arg4: memref<1x512xi32, #tpu.memory_space<vmem>>, %arg5: memref<1x1x512xf32, #tpu.memory_space<vmem>>, %arg6: memref<1x1x512xf32, #tpu.memory_space<vmem>>, %arg7: memref<8x32xf32, #tpu.memory_space<vmem>>) attributes {dimension_semantics = [#tpu.dimension_semantics<parallel>, #tpu.dimension_semantics<arbitrary>], iteration_bounds = array<i64: 1, 1>, scalar_prefetch = 0 : i64, scratch_operands = 1 : i64, tpu.core_type = #tpu.core_type<tc>, window_params = [{pipeline_mode = #tpu.pipeline_mode<synchronous>, transform_indices = @transform_0, window_bounds = array<i64: 8, 32>}, {transform_indices = @transform_1, window_bounds = array<i64: 512, 32>}, {transform_indices = @transform_2, window_bounds = array<i64: 1, 512>}, {transform_indices = @transform_3, window_bounds = array<i64: 1, 1, 512>}, {transform_indices = @transform_4, window_bounds = array<i64: 1, 1, 512>}]} {
    %c0_i32 = arith.constant 0 : i32
    %0 = arith.cmpi eq, %arg1, %c0_i32 : i32
    %1 = arith.extui %0 : i1 to i32
    %c0_i32_0 = arith.constant 0 : i32
    %2 = arith.cmpi ne, %1, %c0_i32_0 : i32
    scf.if %2 {
      %c0_24 = arith.constant 0 : index
      %c0_25 = arith.constant 0 : index
      %48 = vector.load %arg2[%c0_24, %c0_25] : memref<8x32xf32, #tpu.memory_space<vmem>>, vector<8x32xf32>
      %49 = arith.mulf %48, %48 : vector<8x32xf32>
      %cst_26 = arith.constant dense<0.000000e+00> : vector<8xf32>
      %50 = vector.multi_reduction <add>, %49, %cst_26 [1] : vector<8x32xf32> to vector<8xf32>
      %51 = vector.shape_cast %50 : vector<8xf32> to vector<8x1xf32>
      %cst_27 = arith.constant 1.000000e-24 : f32
      %52 = vector.broadcast %cst_27 : f32 to vector<8x1xf32>
      %53 = arith.maximumf %51, %52 : vector<8x1xf32>
      %54 = math.rsqrt %53 : vector<8x1xf32>
      %55 = vector.broadcast %54 : vector<8x1xf32> to vector<8x32xf32>
      %56 = arith.mulf %48, %55 : vector<8x32xf32>
      %c0_28 = arith.constant 0 : index
      %c0_29 = arith.constant 0 : index
      %57 = vector.load %arg7[%c0_28, %c0_29] : memref<8x32xf32, #tpu.memory_space<vmem>>, vector<8x32xf32>
      tpu.vector_store %arg7[%c0_28, %c0_29], %56 {strides = array<i32>} : memref<8x32xf32, #tpu.memory_space<vmem>>, vector<8x32xf32>,
      %cst_30 = arith.constant 0.000000e+00 : f32
      %58 = vector.broadcast %cst_30 : f32 to vector<1x1x512xf32>
      %c0_31 = arith.constant 0 : index
      %c0_32 = arith.constant 0 : index
      %c0_33 = arith.constant 0 : index
      %59 = vector.load %arg5[%c0_31, %c0_32, %c0_33] : memref<1x1x512xf32, #tpu.memory_space<vmem>>, vector<1x1x512xf32>
      tpu.vector_store %arg5[%c0_31, %c0_32, %c0_33], %58 {strides = array<i32>} : memref<1x1x512xf32, #tpu.memory_space<vmem>>, vector<1x1x512xf32>,
      %cst_34 = arith.constant 0.000000e+00 : f32
      %60 = vector.broadcast %cst_34 : f32 to vector<1x1x512xf32>
      %c0_35 = arith.constant 0 : index
      %c0_36 = arith.constant 0 : index
      %c0_37 = arith.constant 0 : index
      %61 = vector.load %arg6[%c0_35, %c0_36, %c0_37] : memref<1x1x512xf32, #tpu.memory_space<vmem>>, vector<1x1x512xf32>
      tpu.vector_store %arg6[%c0_35, %c0_36, %c0_37], %60 {strides = array<i32>} : memref<1x1x512xf32, #tpu.memory_space<vmem>>, vector<1x1x512xf32>,
    } else {
    }
    %c0 = arith.constant 0 : index
    %c0_1 = arith.constant 0 : index
    %3 = vector.load %arg3[%c0, %c0_1] : memref<512x32xf32, #tpu.memory_space<vmem>>, vector<512x32xf32>
    %c0_2 = arith.constant 0 : index
    %c0_3 = arith.constant 0 : index
    %4 = vector.load %arg4[%c0_2, %c0_3] : memref<1x512xi32, #tpu.memory_space<vmem>>, vector<1x512xi32>
    %5 = arith.mulf %3, %3 : vector<512x32xf32>
    %cst = arith.constant dense<0.000000e+00> : vector<512xf32>
    %6 = vector.multi_reduction <add>, %5, %cst [1] : vector<512x32xf32> to vector<512xf32>
    %7 = vector.shape_cast %6 : vector<512xf32> to vector<512x1xf32>
    %cst_4 = arith.constant 1.000000e-24 : f32
    %8 = vector.broadcast %cst_4 : f32 to vector<512x1xf32>
    %9 = arith.maximumf %7, %8 : vector<512x1xf32>
    %10 = math.rsqrt %9 : vector<512x1xf32>
    %11 = vector.broadcast %10 : vector<512x1xf32> to vector<512x32xf32>
    %12 = arith.mulf %3, %11 : vector<512x32xf32>
    %c0_5 = arith.constant 0 : index
    %c0_6 = arith.constant 0 : index
    %13 = vector.load %arg7[%c0_5, %c0_6] : memref<8x32xf32, #tpu.memory_space<vmem>>, vector<8x32xf32>
    %cst_7 = arith.constant dense<0.000000e+00> : vector<8x512xf32>
    %14 = tpu.matmul %13, %12, %cst_7 {dimension_numbers = #tpu.dot_dimension_numbers<[1], [1], [0], [0], [0, 0, 1, 0], [], []>} : vector<8x32xf32>, vector<512x32xf32>, vector<8x512xf32> -> vector<8x512xf32>
    %cst_8 = arith.constant 2.000000e-02 : f32
    %15 = vector.broadcast %cst_8 : f32 to vector<8x512xf32>
    %16 = arith.mulf %14, %15 : vector<8x512xf32>
    %cst_9 = arith.constant dense<0xFF800000> : vector<512xf32>
    %17 = vector.multi_reduction <maximumf>, %16, %cst_9 [0] : vector<8x512xf32> to vector<512xf32>
    %18 = vector.shape_cast %17 : vector<512xf32> to vector<1x512xf32>
    %19 = vector.broadcast %18 : vector<1x512xf32> to vector<8x512xf32>
    %20 = arith.subf %16, %19 : vector<8x512xf32>
    %21 = math.exp %20 : vector<8x512xf32>
    %cst_10 = arith.constant dense<0.000000e+00> : vector<512xf32>
    %22 = vector.multi_reduction <add>, %21, %cst_10 [0] : vector<8x512xf32> to vector<512xf32>
    %23 = vector.shape_cast %22 : vector<512xf32> to vector<1x512xf32>
    %24 = math.log %23 : vector<1x512xf32>
    %25 = arith.addf %18, %24 : vector<1x512xf32>
    %26 = tpu.iota {dimensions = array<i32: 0>} : vector<8x512xi32>
    %27 = vector.broadcast %4 : vector<1x512xi32> to vector<8x512xi32>
    %28 = arith.cmpi eq, %26, %27 : vector<8x512xi32>
    %29 = arith.extui %28 : vector<8x512xi1> to vector<8x512xi32>
    %30 = arith.sitofp %29 : vector<8x512xi32> to vector<8x512xf32>
    %31 = arith.mulf %16, %30 : vector<8x512xf32>
    %cst_11 = arith.constant dense<0.000000e+00> : vector<512xf32>
    %32 = vector.multi_reduction <add>, %31, %cst_11 [0] : vector<8x512xf32> to vector<512xf32>
    %33 = vector.shape_cast %32 : vector<512xf32> to vector<1x512xf32>
    %c255_i32 = arith.constant 255 : i32
    %34 = vector.broadcast %c255_i32 : i32 to vector<1x512xi32>
    %35 = arith.cmpi ne, %4, %34 : vector<1x512xi32>
    %36 = arith.extui %35 : vector<1x512xi1> to vector<1x512xi32>
    %37 = arith.sitofp %36 : vector<1x512xi32> to vector<1x512xf32>
    %38 = arith.subf %25, %33 : vector<1x512xf32>
    %39 = arith.mulf %38, %37 : vector<1x512xf32>
    %c0_12 = arith.constant 0 : index
    %c0_13 = arith.constant 0 : index
    %c0_14 = arith.constant 0 : index
    %40 = vector.load %arg5[%c0_12, %c0_13, %c0_14] : memref<1x1x512xf32, #tpu.memory_space<vmem>>, vector<1x1x512xf32>
    %41 = vector.shape_cast %39 : vector<1x512xf32> to vector<1x1x512xf32>
    %42 = arith.addf %40, %41 : vector<1x1x512xf32>
    %c0_15 = arith.constant 0 : index
    %c0_16 = arith.constant 0 : index
    %c0_17 = arith.constant 0 : index
    %43 = vector.load %arg5[%c0_15, %c0_16, %c0_17] : memref<1x1x512xf32, #tpu.memory_space<vmem>>, vector<1x1x512xf32>
    tpu.vector_store %arg5[%c0_15, %c0_16, %c0_17], %42 {strides = array<i32>} : memref<1x1x512xf32, #tpu.memory_space<vmem>>, vector<1x1x512xf32>,
    %c0_18 = arith.constant 0 : index
    %c0_19 = arith.constant 0 : index
    %c0_20 = arith.constant 0 : index
    %44 = vector.load %arg6[%c0_18, %c0_19, %c0_20] : memref<1x1x512xf32, #tpu.memory_space<vmem>>, vector<1x1x512xf32>
    %45 = vector.shape_cast %37 : vector<1x512xf32> to vector<1x1x512xf32>
    %46 = arith.addf %44, %45 : vector<1x1x512xf32>
    %c0_21 = arith.constant 0 : index
    %c0_22 = arith.constant 0 : index
    %c0_23 = arith.constant 0 : index
    %47 = vector.load %arg6[%c0_21, %c0_22, %c0_23] : memref<1x1x512xf32, #tpu.memory_space<vmem>>, vector<1x1x512xf32>
    tpu.vector_store %arg6[%c0_21, %c0_22, %c0_23], %46 {strides = array<i32>} : memref<1x1x512xf32, #tpu.memory_space<vmem>>, vector<1x1x512xf32>,
    return
  }
  func.func @transform_0(%arg0: i32, %arg1: i32) -> (i32, i32) {
    %c0_i32 = arith.constant 0 : i32
    %c0_i32_0 = arith.constant 0 : i32
    %c0_i32_1 = arith.constant 0 : i32
    return %c0_i32, %c0_i32_0 : i32, i32
  }
  func.func @transform_1(%arg0: i32, %arg1: i32) -> (i32, i32) {
    %c1_i32 = arith.constant 1 : i32
    %0 = arith.muli %arg0, %c1_i32 : i32
    %1 = arith.addi %0, %arg1 : i32
    %c0_i32 = arith.constant 0 : i32
    %c0_i32_0 = arith.constant 0 : i32
    return %1, %c0_i32 : i32, i32
  }
  func.func @transform_2(%arg0: i32, %arg1: i32) -> (i32, i32) {
    %c1_i32 = arith.constant 1 : i32
    %0 = arith.muli %arg0, %c1_i32 : i32
    %1 = arith.addi %0, %arg1 : i32
    %c0_i32 = arith.constant 0 : i32
    %c0_i32_0 = arith.constant 0 : i32
    return %c0_i32, %1 : i32, i32
  }
  func.func @transform_3(%arg0: i32, %arg1: i32) -> (i32, i32, i32) {
    %c0_i32 = arith.constant 0 : i32
    %c0_i32_0 = arith.constant 0 : i32
    %c0_i32_1 = arith.constant 0 : i32
    return %arg0, %c0_i32, %c0_i32_0 : i32, i32, i32
  }
  func.func @transform_4(%arg0: i32, %arg1: i32) -> (i32, i32, i32) {
    %c0_i32 = arith.constant 0 : i32
    %c0_i32_0 = arith.constant 0 : i32
    %c0_i32_1 = arith.constant 0 : i32
    return %arg0, %c0_i32, %c0_i32_0 : i32, i32, i32
  }
}

</mosaic_0001>

<llo_original>
// kernel: prototype_contrastive_loss.1
$region0: #{prototype_contrastive_loss.1}
  #allocation0 [shape = 'u32[]', space=smem, size = 0x4, offset = 0x4, fixed_abs, tag = 'smem constant byte address 0x4 - core index']
  #allocation1 [shape = 'u32[144,128]{1,0:T(1,128)}', space=vmem, size = 0x12000, scoped, tag = 'internal scratch']
  #allocation2 [shape = 'f32[8,32]{1,0:T(8,128)}', space=vmem, size = 0x1000, scoped, tag = 'scratch operand']
  %s0 = inlined_call_operand.vmem [shape: f32[8,32], index: 0, kind: input, shape index: {}]
  %s1 = inlined_call_operand.vmem [shape: f32[512,32], index: 1, kind: input, shape index: {}]
  %s2 = inlined_call_operand.vmem [shape: s32[1,512], index: 2, kind: input, shape index: {}]
  %s3 = inlined_call_operand.vmem [shape: f32[1,1,512], index: 3, kind: output, shape index: {0}]
  %s4 = inlined_call_operand.vmem [shape: f32[1,1,512], index: 4, kind: output, shape index: {1}]
  %5 = xla_tuple %s3, %s4
  %s6 = sld [smem:[#allocation0]]
  $region34: #{prototype_contrastive_loss.1} parent=0
    _
  %s8 = ssub.s32 1, %s6
  %s9 = scalar_select 0, %s8, %s6
  // Predicated region
  $region2: #{prototype_contrastive_loss.1} parent=0 // pred_check
    _
  $region3: #{prototype_contrastive_loss.1} parent=0 // pred_check_branch
    %11 = sbr.rel (0) target = $region5
  $region4: #{prototype_contrastive_loss.1} parent=0 // pred_region
    _
  $region5: #{prototype_contrastive_loss.1} parent=0 // pred_fallthru
    _
  // Predicated region
  $region6: #{prototype_contrastive_loss.1} parent=0 // pred_check
    _
  $region7: #{prototype_contrastive_loss.1} parent=0 // pred_check_branch
    %13 = sbr.rel (0) target = $region9
  $region8: #{prototype_contrastive_loss.1} parent=0 // pred_region
    %s14 = sadd.s32 0, 0
    %s15 = smul.u32 64, %s14
    %p16 = scmp.lt.s32.totalorder %s15, 63
    %s17 = scalar_select %p16, %s15, 63
    %s18 = smul.addr %s17, 8
    %s19 = scalar_lea.vmem %s1, %s18
    %s20 = sadd.s32 0, 0
    %s21 = smul.u32 64, %s20
  $region9: #{prototype_contrastive_loss.1} parent=0 // pred_fallthru
    _
  // Predicated region
  $region10: #{prototype_contrastive_loss.1} parent=0 // pred_check
    _
  $region11: #{prototype_contrastive_loss.1} parent=0 // pred_check_branch
    %23 = sbr.rel (0) target = $region13
  $region12: #{prototype_contrastive_loss.1} parent=0 // pred_region
    %s24 = sadd.s32 0, 0
    %s25 = smul.u32 4, %s24
    %p26 = scmp.lt.s32.totalorder %s25, 3
    %s27 = scalar_select %p26, %s25, 3
    %s28 = scalar_lea.vmem %s2, %s27
    %s29 = sadd.s32 0, 0
    %s30 = smul.u32 4, %s29
  $region13: #{prototype_contrastive_loss.1} parent=0 // pred_fallthru
    _
  %s31 = sadd.s32 0, 0
  %s32 = smul.u32 64, %s31
  %p33 = scmp.lt.s32.totalorder %s32, 63
  %s34 = scalar_select %p33, %s32, 63
  %s35 = smul.addr %s34, 8
  %s36 = scalar_lea.vmem %s1, %s35
  %s37 = sadd.s32 0, 0
  %s38 = smul.u32 4, %s37
  %p39 = scmp.lt.s32.totalorder %s38, 3
  %s40 = scalar_select %p39, %s38, 3
  %s41 = scalar_lea.vmem %s2, %s40
  %s42 = sadd.s32 0, 0
  %s43 = smul.u32 64, %s42
  %p44 = scmp.lt.s32.totalorder %s43, 63
  %s45 = scalar_select %p44, %s43, 63
  %s46 = smul.addr %s45, 8
  %s47 = scalar_lea.vmem %s1, %s46
  %s48 = sadd.s32 0, 0
  %s49 = smul.u32 64, %s48
  %s50 = sadd.s32 0, 0
  %s51 = smul.u32 4, %s50
  %p52 = scmp.lt.s32.totalorder %s51, 3
  %s53 = scalar_select %p52, %s51, 3
  %s54 = scalar_lea.vmem %s2, %s53
  %s55 = sadd.s32 0, 0
  %s56 = smul.u32 4, %s55
  %p57 = scmp.eq.s32.totalorder 0, 0
  // Predicated region
  $region14: #{prototype_contrastive_loss.1} parent=0 // pred_check
    %p58 = pneg %p57
  $region15: #{prototype_contrastive_loss.1} parent=0 // pred_check_branch
    %60 = sbr.rel (%p58) target = $region17
  $region16: #{prototype_contrastive_loss.1} parent=0 // pred_region
    %v61 = vld [vmem:[%s0] sm:$0xff]
    %v62 = vmul.f32 %v61, %v61
    %vm63 = vcmask 261120
    %v64 = vsel %vm63, %v62, 0.0
    %65 = vadd.xlane.f32.xlu0 %v64
    %v66 = vpop.xlane.xlu0 %65
    %v67 = vmax.f32 %v66, 1e-24
    %v68 = vrsqrt.pop %v67
    %v69 = vmul.f32 %v61, %v68
    %70 = vst.msk [vmem:[#allocation2] sm:$0xff] %vm63, %v69
    %v71 = vlaneseq
    %vm72 = vcmp.ge.s32.totalorder %v71, 0
    %vm73 = vcmp.lt.s32.totalorder %v71, 512
    %vm74 = vmand %vm72, %vm73
    %75 = vst.msk [vmem:[%s3] sm:$0xf] %vm74, 0.0
    %76 = vst.msk [vmem:[%s4] sm:$0xf] %vm74, 0.0
  $region17: #{prototype_contrastive_loss.1} parent=0 // pred_fallthru
    _
  %v77 = vld [vmem:[%s47] sm:$0xff]
  %v78 = vld [vmem:[%s47 + $0x8] sm:$0xff]
  %v79 = vld [vmem:[%s47 + $0x10] sm:$0xff]
  %v80 = vld [vmem:[%s47 + $0x18] sm:$0xff]
  %v81 = vld [vmem:[%s47 + $0x20] sm:$0xff]
  %v82 = vld [vmem:[%s47 + $0x28] sm:$0xff]
  %v83 = vld [vmem:[%s47 + $0x30] sm:$0xff]
  %v84 = vld [vmem:[%s47 + $0x38] sm:$0xff]
  %v85 = vld [vmem:[%s47 + $0x40] sm:$0xff]
  %v86 = vld [vmem:[%s47 + $0x48] sm:$0xff]
  %v87 = vld [vmem:[%s47 + $0x50] sm:$0xff]
  %v88 = vld [vmem:[%s47 + $0x58] sm:$0xff]
  %v89 = vld [vmem:[%s47 + $0x60] sm:$0xff]
  %v90 = vld [vmem:[%s47 + $0x68] sm:$0xff]
  %v91 = vld [vmem:[%s47 + $0x70] sm:$0xff]
  %v92 = vld [vmem:[%s47 + $0x78] sm:$0xff]
  %v93 = vld [vmem:[%s47 + $0x80] sm:$0xff]
  %v94 = vld [vmem:[%s47 + $0x88] sm:$0xff]
  %v95 = vld [vmem:[%s47 + $0x90] sm:$0xff]
  %v96 = vld [vmem:[%s47 + $0x98] sm:$0xff]
  %v97 = vld [vmem:[%s47 + $0xa0] sm:$0xff]
  %v98 = vld [vmem:[%s47 + $0xa8] sm:$0xff]
  %v99 = vld [vmem:[%s47 + $0xb0] sm:$0xff]
  %v100 = vld [vmem:[%s47 + $0xb8] sm:$0xff]
  %v101 = vld [vmem:[%s47 + $0xc0] sm:$0xff]
  %v102 = vld [vmem:[%s47 + $0xc8] sm:$0xff]
  %v103 = vld [vmem:[%s47 + $0xd0] sm:$0xff]
  %v104 = vld [vmem:[%s47 + $0xd8] sm:$0xff]
  %v105 = vld [vmem:[%s47 + $0xe0] sm:$0xff]
  %v106 = vld [vmem:[%s47 + $0xe8] sm:$0xff]
  %v107 = vld [vmem:[%s47 + $0xf0] sm:$0xff]
  %v108 = vld [vmem:[%s47 + $0xf8] sm:$0xff]
  %v109 = vld [vmem:[%s47 + $0x100] sm:$0xff]
  %v110 = vld [vmem:[%s47 + $0x108] sm:$0xff]
  %v111 = vld [vmem:[%s47 + $0x110] sm:$0xff]
  %v112 = vld [vmem:[%s47 + $0x118] sm:$0xff]
  %v113 = vld [vmem:[%s47 + $0x120] sm:$0xff]
  %v114 = vld [vmem:[%s47 + $0x128] sm:$0xff]
  %v115 = vld [vmem:[%s47 + $0x130] sm:$0xff]
  %v116 = vld [vmem:[%s47 + $0x138] sm:$0xff]
  %v117 = vld [vmem:[%s47 + $0x140] sm:$0xff]
  %v118 = vld [vmem:[%s47 + $0x148] sm:$0xff]
  %v119 = vld [vmem:[%s47 + $0x150] sm:$0xff]
  %v120 = vld [vmem:[%s47 + $0x158] sm:$0xff]
  %v121 = vld [vmem:[%s47 + $0x160] sm:$0xff]
  %v122 = vld [vmem:[%s47 + $0x168] sm:$0xff]
  %v123 = vld [vmem:[%s47 + $0x170] sm:$0xff]
  %v124 = vld [vmem:[%s47 + $0x178] sm:$0xff]
  %v125 = vld [vmem:[%s47 + $0x180] sm:$0xff]
  %v126 = vld [vmem:[%s47 + $0x188] sm:$0xff]
  %v127 = vld [vmem:[%s47 + $0x190] sm:$0xff]
  %v128 = vld [vmem:[%s47 + $0x198] sm:$0xff]
  %v129 = vld [vmem:[%s47 + $0x1a0] sm:$0xff]
  %v130 = vld [vmem:[%s47 + $0x1a8] sm:$0xff]
  %v131 = vld [vmem:[%s47 + $0x1b0] sm:$0xff]
  %v132 = vld [vmem:[%s47 + $0x1b8] sm:$0xff]
  %v133 = vld [vmem:[%s47 + $0x1c0] sm:$0xff]
  %v134 = vld [vmem:[%s47 + $0x1c8] sm:$0xff]
  %v135 = vld [vmem:[%s47 + $0x1d0] sm:$0xff]
  %v136 = vld [vmem:[%s47 + $0x1d8] sm:$0xff]
  %v137 = vld [vmem:[%s47 + $0x1e0] sm:$0xff]
  %v138 = vld [vmem:[%s47 + $0x1e8] sm:$0xff]
  %v139 = vld [vmem:[%s47 + $0x1f0] sm:$0xff]
  %v140 = vld [vmem:[%s47 + $0x1f8] sm:$0xff]
  %v141 = vld [vmem:[%s54] sm:$0xf]
  %v142 = vmul.f32 %v77, %v77
  %v143 = vmul.f32 %v78, %v78
  %v144 = vmul.f32 %v79, %v79
  %v145 = vmul.f32 %v80, %v80
  %v146 = vmul.f32 %v81, %v81
  %v147 = vmul.f32 %v82, %v82
  %v148 = vmul.f32 %v83, %v83
  %v149 = vmul.f32 %v84, %v84
  %v150 = vmul.f32 %v85, %v85
  %v151 = vmul.f32 %v86, %v86
  %v152 = vmul.f32 %v87, %v87
  %v153 = vmul.f32 %v88, %v88
  %v154 = vmul.f32 %v89, %v89
  %v155 = vmul.f32 %v90, %v90
  %v156 = vmul.f32 %v91, %v91
  %v157 = vmul.f32 %v92, %v92
  %v158 = vmul.f32 %v93, %v93
  %v159 = vmul.f32 %v94, %v94
  %v160 = vmul.f32 %v95, %v95
  %v161 = vmul.f32 %v96, %v96
  %v162 = vmul.f32 %v97, %v97
  %v163 = vmul.f32 %v98, %v98
  %v164 = vmul.f32 %v99, %v99
  %v165 = vmul.f32 %v100, %v100
  %v166 = vmul.f32 %v101, %v101
  %v167 = vmul.f32 %v102, %v102
  %v168 = vmul.f32 %v103, %v103
  %v169 = vmul.f32 %v104, %v104
  %v170 = vmul.f32 %v105, %v105
  %v171 = vmul.f32 %v106, %v106
  %v172 = vmul.f32 %v107, %v107
  %v173 = vmul.f32 %v108, %v108
  %v174 = vmul.f32 %v109, %v109
  %v175 = vmul.f32 %v110, %v110
  %v176 = vmul.f32 %v111, %v111
  %v177 = vmul.f32 %v112, %v112
  %v178 = vmul.f32 %v113, %v113
  %v179 = vmul.f32 %v114, %v114
  %v180 = vmul.f32 %v115, %v115
  %v181 = vmul.f32 %v116, %v116
  %v182 = vmul.f32 %v117, %v117
  %v183 = vmul.f32 %v118, %v118
  %v184 = vmul.f32 %v119, %v119
  %v185 = vmul.f32 %v120, %v120
  %v186 = vmul.f32 %v121, %v121
  %v187 = vmul.f32 %v122, %v122
  %v188 = vmul.f32 %v123, %v123
  %v189 = vmul.f32 %v124, %v124
  %v190 = vmul.f32 %v125, %v125
  %v191 = vmul.f32 %v126, %v126
  %v192 = vmul.f32 %v127, %v127
  %v193 = vmul.f32 %v128, %v128
  %v194 = vmul.f32 %v129, %v129
  %v195 = vmul.f32 %v130, %v130
  %v196 = vmul.f32 %v131, %v131
  %v197 = vmul.f32 %v132, %v132
  %v198 = vmul.f32 %v133, %v133
  %v199 = vmul.f32 %v134, %v134
  %v200 = vmul.f32 %v135, %v135
  %v201 = vmul.f32 %v136, %v136
  %v202 = vmul.f32 %v137, %v137
  %v203 = vmul.f32 %v138, %v138
  %v204 = vmul.f32 %v139, %v139
  %v205 = vmul.f32 %v140, %v140
  %vm206 = vcmask 261120
  %v207 = vsel %vm206, %v142, 0.0
  %208 = vadd.xlane.f32.xlu0 %v207
  %v209 = vpop.xlane.xlu0 %208
  %v210 = vsel %vm206, %v143, 0.0
  %211 = vadd.xlane.f32.xlu0 %v210
  %v212 = vpop.xlane.xlu0 %211
  %v213 = vsel %vm206, %v144, 0.0
  %214 = vadd.xlane.f32.xlu0 %v213
  %v215 = vpop.xlane.xlu0 %214
  %v216 = vsel %vm206, %v145, 0.0
  %217 = vadd.xlane.f32.xlu0 %v216
  %v218 = vpop.xlane.xlu0 %217
  %v219 = vsel %vm206, %v146, 0.0
  %220 = vadd.xlane.f32.xlu0 %v219
  %v221 = vpop.xlane.xlu0 %220
  %v222 = vsel %vm206, %v147, 0.0
  %223 = vadd.xlane.f32.xlu0 %v222
  %v224 = vpop.xlane.xlu0 %223
  %v225 = vsel %vm206, %v148, 0.0
  %226 = vadd.xlane.f32.xlu0 %v225
  %v227 = vpop.xlane.xlu0 %226
  %v228 = vsel %vm206, %v149, 0.0
  %229 = vadd.xlane.f32.xlu0 %v228
  %v230 = vpop.xlane.xlu0 %229
  %v231 = vsel %vm206, %v150, 0.0
  %232 = vadd.xlane.f32.xlu0 %v231
  %v233 = vpop.xlane.xlu0 %232
  %v234 = vsel %vm206, %v151, 0.0
  %235 = vadd.xlane.f32.xlu0 %v234
  %v236 = vpop.xlane.xlu0 %235
  %v237 = vsel %vm206, %v152, 0.0
  %238 = vadd.xlane.f32.xlu0 %v237
  %v239 = vpop.xlane.xlu0 %238
  %v240 = vsel %vm206, %v153, 0.0
  %241 = vadd.xlane.f32.xlu0 %v240
  %v242 = vpop.xlane.xlu0 %241
  %v243 = vsel %vm206, %v154, 0.0
  %244 = vadd.xlane.f32.xlu0 %v243
  %v245 = vpop.xlane.xlu0 %244
  %v246 = vsel %vm206, %v155, 0.0
  %247 = vadd.xlane.f32.xlu0 %v246
  %v248 = vpop.xlane.xlu0 %247
  %v249 = vsel %vm206, %v156, 0.0
  %250 = vadd.xlane.f32.xlu0 %v249
  %v251 = vpop.xlane.xlu0 %250
  %v252 = vsel %vm206, %v157, 0.0
  %253 = vadd.xlane.f32.xlu0 %v252
  %v254 = vpop.xlane.xlu0 %253
  %v255 = vsel %vm206, %v158, 0.0
  %256 = vadd.xlane.f32.xlu0 %v255
  %v257 = vpop.xlane.xlu0 %256
  %v258 = vsel %vm206, %v159, 0.0
  %259 = vadd.xlane.f32.xlu0 %v258
  %v260 = vpop.xlane.xlu0 %259
  %v261 = vsel %vm206, %v160, 0.0
  %262 = vadd.xlane.f32.xlu0 %v261
  %v263 = vpop.xlane.xlu0 %262
  %v264 = vsel %vm206, %v161, 0.0
  %265 = vadd.xlane.f32.xlu0 %v264
  %v266 = vpop.xlane.xlu0 %265
  %v267 = vsel %vm206, %v162, 0.0
  %268 = vadd.xlane.f32.xlu0 %v267
  %v269 = vpop.xlane.xlu0 %268
  %v270 = vsel %vm206, %v163, 0.0
  %271 = vadd.xlane.f32.xlu0 %v270
  %v272 = vpop.xlane.xlu0 %271
  %v273 = vsel %vm206, %v164, 0.0
  %274 = vadd.xlane.f32.xlu0 %v273
  %v275 = vpop.xlane.xlu0 %274
  %v276 = vsel %vm206, %v165, 0.0
  %277 = vadd.xlane.f32.xlu0 %v276
  %v278 = vpop.xlane.xlu0 %277
  %v279 = vsel %vm206, %v166, 0.0
  %280 = vadd.xlane.f32.xlu0 %v279
  %v281 = vpop.xlane.xlu0 %280
  %v282 = vsel %vm206, %v167, 0.0
  %283 = vadd.xlane.f32.xlu0 %v282
  %v284 = vpop.xlane.xlu0 %283
  %v285 = vsel %vm206, %v168, 0.0
  %286 = vadd.xlane.f32.xlu0 %v285
  %v287 = vpop.xlane.xlu0 %286
  %v288 = vsel %vm206, %v169, 0.0
  %289 = vadd.xlane.f32.xlu0 %v288
  %v290 = vpop.xlane.xlu0 %289
  %v291 = vsel %vm206, %v170, 0.0
  %292 = vadd.xlane.f32.xlu0 %v291
  %v293 = vpop.xlane.xlu0 %292
  %v294 = vsel %vm206, %v171, 0.0
  %295 = vadd.xlane.f32.xlu0 %v294
  %v296 = vpop.xlane.xlu0 %295
  %v297 = vsel %vm206, %v172, 0.0
  %298 = vadd.xlane.f32.xlu0 %v297
  %v299 = vpop.xlane.xlu0 %298
  %v300 = vsel %vm206, %v173, 0.0
  %301 = vadd.xlane.f32.xlu0 %v300
  %v302 = vpop.xlane.xlu0 %301
  %v303 = vsel %vm206, %v174, 0.0
  %304 = vadd.xlane.f32.xlu0 %v303
  %v305 = vpop.xlane.xlu0 %304
  %v306 = vsel %vm206, %v175, 0.0
  %307 = vadd.xlane.f32.xlu0 %v306
  %v308 = vpop.xlane.xlu0 %307
  %v309 = vsel %vm206, %v176, 0.0
  %310 = vadd.xlane.f32.xlu0 %v309
  %v311 = vpop.xlane.xlu0 %310
  %v312 = vsel %vm206, %v177, 0.0
  %313 = vadd.xlane.f32.xlu0 %v312
  %v314 = vpop.xlane.xlu0 %313
  %v315 = vsel %vm206, %v178, 0.0
  %316 = vadd.xlane.f32.xlu0 %v315
  %v317 = vpop.xlane.xlu0 %316
  %v318 = vsel %vm206, %v179, 0.0
  %319 = vadd.xlane.f32.xlu0 %v318
  %v320 = vpop.xlane.xlu0 %319
  %v321 = vsel %vm206, %v180, 0.0
  %322 = vadd.xlane.f32.xlu0 %v321
  %v323 = vpop.xlane.xlu0 %322
  %v324 = vsel %vm206, %v181, 0.0
  %325 = vadd.xlane.f32.xlu0 %v324
  %v326 = vpop.xlane.xlu0 %325
  %v327 = vsel %vm206, %v182, 0.0
  %328 = vadd.xlane.f32.xlu0 %v327
  %v329 = vpop.xlane.xlu0 %328
  %v330 = vsel %vm206, %v183, 0.0
  %331 = vadd.xlane.f32.xlu0 %v330
  %v332 = vpop.xlane.xlu0 %331
  %v333 = vsel %vm206, %v184, 0.0
  %334 = vadd.xlane.f32.xlu0 %v333
  %v335 = vpop.xlane.xlu0 %334
  %v336 = vsel %vm206, %v185, 0.0
  %337 = vadd.xlane.f32.xlu0 %v336
  %v338 = vpop.xlane.xlu0 %337
  %v339 = vsel %vm206, %v186, 0.0
  %340 = vadd.xlane.f32.xlu0 %v339
  %v341 = vpop.xlane.xlu0 %340
  %v342 = vsel %vm206, %v187, 0.0
  %343 = vadd.xlane.f32.xlu0 %v342
  %v344 = vpop.xlane.xlu0 %343
  %v345 = vsel %vm206, %v188, 0.0
  %346 = vadd.xlane.f32.xlu0 %v345
  %v347 = vpop.xlane.xlu0 %346
  %v348 = vsel %vm206, %v189, 0.0
  %349 = vadd.xlane.f32.xlu0 %v348
  %v350 = vpop.xlane.xlu0 %349
  %v351 = vsel %vm206, %v190, 0.0
  %352 = vadd.xlane.f32.xlu0 %v351
  %v353 = vpop.xlane.xlu0 %352
  %v354 = vsel %vm206, %v191, 0.0
  %355 = vadd.xlane.f32.xlu0 %v354
  %v356 = vpop.xlane.xlu0 %355
  %v357 = vsel %vm206, %v192, 0.0
  %358 = vadd.xlane.f32.xlu0 %v357
  %v359 = vpop.xlane.xlu0 %358
  %v360 = vsel %vm206, %v193, 0.0
  %361 = vadd.xlane.f32.xlu0 %v360
  %v362 = vpop.xlane.xlu0 %361
  %v363 = vsel %vm206, %v194, 0.0
  %364 = vadd.xlane.f32.xlu0 %v363
  %v365 = vpop.xlane.xlu0 %364
  %v366 = vsel %vm206, %v195, 0.0
  %367 = vadd.xlane.f32.xlu0 %v366
  %v368 = vpop.xlane.xlu0 %367
  %v369 = vsel %vm206, %v196, 0.0
  %370 = vadd.xlane.f32.xlu0 %v369
  %v371 = vpop.xlane.xlu0 %370
  %v372 = vsel %vm206, %v197, 0.0
  %373 = vadd.xlane.f32.xlu0 %v372
  %v374 = vpop.xlane.xlu0 %373
  %v375 = vsel %vm206, %v198, 0.0
  %376 = vadd.xlane.f32.xlu0 %v375
  %v377 = vpop.xlane.xlu0 %376
  %v378 = vsel %vm206, %v199, 0.0
  %379 = vadd.xlane.f32.xlu0 %v378
  %v380 = vpop.xlane.xlu0 %379
  %v381 = vsel %vm206, %v200, 0.0
  %382 = vadd.xlane.f32.xlu0 %v381
  %v383 = vpop.xlane.xlu0 %382
  %v384 = vsel %vm206, %v201, 0.0
  %385 = vadd.xlane.f32.xlu0 %v384
  %v386 = vpop.xlane.xlu0 %385
  %v387 = vsel %vm206, %v202, 0.0
  %388 = vadd.xlane.f32.xlu0 %v387
  %v389 = vpop.xlane.xlu0 %388
  %v390 = vsel %vm206, %v203, 0.0
  %391 = vadd.xlane.f32.xlu0 %v390
  %v392 = vpop.xlane.xlu0 %391
  %v393 = vsel %vm206, %v204, 0.0
  %394 = vadd.xlane.f32.xlu0 %v393
  %v395 = vpop.xlane.xlu0 %394
  %v396 = vsel %vm206, %v205, 0.0
  %397 = vadd.xlane.f32.xlu0 %v396
  %v398 = vpop.xlane.xlu0 %397
  %v399 = vmax.f32 %v209, 1e-24
  %v400 = vmax.f32 %v212, 1e-24
  %v401 = vmax.f32 %v215, 1e-24
  %v402 = vmax.f32 %v218, 1e-24
  %v403 = vmax.f32 %v221, 1e-24
  %v404 = vmax.f32 %v224, 1e-24
  %v405 = vmax.f32 %v227, 1e-24
  %v406 = vmax.f32 %v230, 1e-24
  %v407 = vmax.f32 %v233, 1e-24
  %v408 = vmax.f32 %v236, 1e-24
  %v409 = vmax.f32 %v239, 1e-24
  %v410 = vmax.f32 %v242, 1e-24
  %v411 = vmax.f32 %v245, 1e-24
  %v412 = vmax.f32 %v248, 1e-24
  %v413 = vmax.f32 %v251, 1e-24
  %v414 = vmax.f32 %v254, 1e-24
  %v415 = vmax.f32 %v257, 1e-24
  %v416 = vmax.f32 %v260, 1e-24
  %v417 = vmax.f32 %v263, 1e-24
  %v418 = vmax.f32 %v266, 1e-24
  %v419 = vmax.f32 %v269, 1e-24
  %v420 = vmax.f32 %v272, 1e-24
  %v421 = vmax.f32 %v275, 1e-24
  %v422 = vmax.f32 %v278, 1e-24
  %v423 = vmax.f32 %v281, 1e-24
  %v424 = vmax.f32 %v284, 1e-24
  %v425 = vmax.f32 %v287, 1e-24
  %v426 = vmax.f32 %v290, 1e-24
  %v427 = vmax.f32 %v293, 1e-24
  %v428 = vmax.f32 %v296, 1e-24
  %v429 = vmax.f32 %v299, 1e-24
  %v430 = vmax.f32 %v302, 1e-24
  %v431 = vmax.f32 %v305, 1e-24
  %v432 = vmax.f32 %v308, 1e-24
  %v433 = vmax.f32 %v311, 1e-24
  %v434 = vmax.f32 %v314, 1e-24
  %v435 = vmax.f32 %v317, 1e-24
  %v436 = vmax.f32 %v320, 1e-24
  %v437 = vmax.f32 %v323, 1e-24
  %v438 = vmax.f32 %v326, 1e-24
  %v439 = vmax.f32 %v329, 1e-24
  %v440 = vmax.f32 %v332, 1e-24
  %v441 = vmax.f32 %v335, 1e-24
  %v442 = vmax.f32 %v338, 1e-24
  %v443 = vmax.f32 %v341, 1e-24
  %v444 = vmax.f32 %v344, 1e-24
  %v445 = vmax.f32 %v347, 1e-24
  %v446 = vmax.f32 %v350, 1e-24
  %v447 = vmax.f32 %v353, 1e-24
  %v448 = vmax.f32 %v356, 1e-24
  %v449 = vmax.f32 %v359, 1e-24
  %v450 = vmax.f32 %v362, 1e-24
  %v451 = vmax.f32 %v365, 1e-24
  %v452 = vmax.f32 %v368, 1e-24
  %v453 = vmax.f32 %v371, 1e-24
  %v454 = vmax.f32 %v374, 1e-24
  %v455 = vmax.f32 %v377, 1e-24
  %v456 = vmax.f32 %v380, 1e-24
  %v457 = vmax.f32 %v383, 1e-24
  %v458 = vmax.f32 %v386, 1e-24
  %v459 = vmax.f32 %v389, 1e-24
  %v460 = vmax.f32 %v392, 1e-24
  %v461 = vmax.f32 %v395, 1e-24
  %v462 = vmax.f32 %v398, 1e-24
  %v463 = vrsqrt.pop %v399
  %v464 = vrsqrt.pop %v400
  %v465 = vrsqrt.pop %v401
  %v466 = vrsqrt.pop %v402
  %v467 = vrsqrt.pop %v403
  %v468 = vrsqrt.pop %v404
  %v469 = vrsqrt.pop %v405
  %v470 = vrsqrt.pop %v406
  %v471 = vrsqrt.pop %v407
  %v472 = vrsqrt.pop %v408
  %v473 = vrsqrt.pop %v409
  %v474 = vrsqrt.pop %v410
  %v475 = vrsqrt.pop %v411
  %v476 = vrsqrt.pop %v412
  %v477 = vrsqrt.pop %v413
  %v478 = vrsqrt.pop %v414
  %v479 = vrsqrt.pop %v415
  %v480 = vrsqrt.pop %v416
  %v481 = vrsqrt.pop %v417
  %v482 = vrsqrt.pop %v418
  %v483 = vrsqrt.pop %v419
  %v484 = vrsqrt.pop %v420
  %v485 = vrsqrt.pop %v421
  %v486 = vrsqrt.pop %v422
  %v487 = vrsqrt.pop %v423
  %v488 = vrsqrt.pop %v424
  %v489 = vrsqrt.pop %v425
  %v490 = vrsqrt.pop %v426
  %v491 = vrsqrt.pop %v427
  %v492 = vrsqrt.pop %v428
  %v493 = vrsqrt.pop %v429
  %v494 = vrsqrt.pop %v430
  %v495 = vrsqrt.pop %v431
  %v496 = vrsqrt.pop %v432
  %v497 = vrsqrt.pop %v433
  %v498 = vrsqrt.pop %v434
  %v499 = vrsqrt.pop %v435
  %v500 = vrsqrt.pop %v436
  %v501 = vrsqrt.pop %v437
  %v502 = vrsqrt.pop %v438
  %v503 = vrsqrt.pop %v439
  %v504 = vrsqrt.pop %v440
  %v505 = vrsqrt.pop %v441
  %v506 = vrsqrt.pop %v442
  %v507 = vrsqrt.pop %v443
  %v508 = vrsqrt.pop %v444
  %v509 = vrsqrt.pop %v445
  %v510 = vrsqrt.pop %v446
  %v511 = vrsqrt.pop %v447
  %v512 = vrsqrt.pop %v448
  %v513 = vrsqrt.pop %v449
  %v514 = vrsqrt.pop %v450
  %v515 = vrsqrt.pop %v451
  %v516 = vrsqrt.pop %v452
  %v517 = vrsqrt.pop %v453
  %v518 = vrsqrt.pop %v454
  %v519 = vrsqrt.pop %v455
  %v520 = vrsqrt.pop %v456
  %v521 = vrsqrt.pop %v457
  %v522 = vrsqrt.pop %v458
  %v523 = vrsqrt.pop %v459
  %v524 = vrsqrt.pop %v460
  %v525 = vrsqrt.pop %v461
  %v526 = vrsqrt.pop %v462
  %v527 = vmul.f32 %v77, %v463
  %v528 = vmul.f32 %v78, %v464
  %v529 = vmul.f32 %v79, %v465
  %v530 = vmul.f32 %v80, %v466
  %v531 = vmul.f32 %v81, %v467
  %v532 = vmul.f32 %v82, %v468
  %v533 = vmul.f32 %v83, %v469
  %v534 = vmul.f32 %v84, %v470
  %v535 = vmul.f32 %v85, %v471
  %v536 = vmul.f32 %v86, %v472
  %v537 = vmul.f32 %v87, %v473
  %v538 = vmul.f32 %v88, %v474
  %v539 = vmul.f32 %v89, %v475
  %v540 = vmul.f32 %v90, %v476
  %v541 = vmul.f32 %v91, %v477
  %v542 = vmul.f32 %v92, %v478
  %v543 = vmul.f32 %v93, %v479
  %v544 = vmul.f32 %v94, %v480
  %v545 = vmul.f32 %v95, %v481
  %v546 = vmul.f32 %v96, %v482
  %v547 = vmul.f32 %v97, %v483
  %v548 = vmul.f32 %v98, %v484
  %v549 = vmul.f32 %v99, %v485
  %v550 = vmul.f32 %v100, %v486
  %v551 = vmul.f32 %v101, %v487
  %v552 = vmul.f32 %v102, %v488
  %v553 = vmul.f32 %v103, %v489
  %v554 = vmul.f32 %v104, %v490
  %v555 = vmul.f32 %v105, %v491
  %v556 = vmul.f32 %v106, %v492
  %v557 = vmul.f32 %v107, %v493
  %v558 = vmul.f32 %v108, %v494
  %v559 = vmul.f32 %v109, %v495
  %v560 = vmul.f32 %v110, %v496
  %v561 = vmul.f32 %v111, %v497
  %v562 = vmul.f32 %v112, %v498
  %v563 = vmul.f32 %v113, %v499
  %v564 = vmul.f32 %v114, %v500
  %v565 = vmul.f32 %v115, %v501
  %v566 = vmul.f32 %v116, %v502
  %v567 = vmul.f32 %v117, %v503
  %v568 = vmul.f32 %v118, %v504
  %v569 = vmul.f32 %v119, %v505
  %v570 = vmul.f32 %v120, %v506
  %v571 = vmul.f32 %v121, %v507
  %v572 = vmul.f32 %v122, %v508
  %v573 = vmul.f32 %v123, %v509
  %v574 = vmul.f32 %v124, %v510
  %v575 = vmul.f32 %v125, %v511
  %v576 = vmul.f32 %v126, %v512
  %v577 = vmul.f32 %v127, %v513
  %v578 = vmul.f32 %v128, %v514
  %v579 = vmul.f32 %v129, %v515
  %v580 = vmul.f32 %v130, %v516
  %v581 = vmul.f32 %v131, %v517
  %v582 = vmul.f32 %v132, %v518
  %v583 = vmul.f32 %v133, %v519
  %v584 = vmul.f32 %v134, %v520
  %v585 = vmul.f32 %v135, %v521
  %v586 = vmul.f32 %v136, %v522
  %v587 = vmul.f32 %v137, %v523
  %v588 = vmul.f32 %v138, %v524
  %v589 = vmul.f32 %v139, %v525
  %v590 = vmul.f32 %v140, %v526
  %v591 = vld [vmem:[#allocation2] sm:$0xff]
  %v593 = vsel %vm206, %v591, 0
  %v596 = vsel %vm206, %v527, 0
  %v599 = vsel %vm206, %v528, 0
  %v602 = vsel %vm206, %v529, 0
  %v605 = vsel %vm206, %v530, 0
  %v608 = vsel %vm206, %v531, 0
  %v611 = vsel %vm206, %v532, 0
  %v614 = vsel %vm206, %v533, 0
  %v617 = vsel %vm206, %v534, 0
  %v620 = vsel %vm206, %v535, 0
  %v623 = vsel %vm206, %v536, 0
  %v626 = vsel %vm206, %v537, 0
  %v629 = vsel %vm206, %v538, 0
  %v632 = vsel %vm206, %v539, 0
  %v635 = vsel %vm206, %v540, 0
  %v638 = vsel %vm206, %v541, 0
  %v641 = vsel %vm206, %v542, 0
  %v644 = vsel %vm206, %v543, 0
  %v647 = vsel %vm206, %v544, 0
  %v650 = vsel %vm206, %v545, 0
  %v653 = vsel %vm206, %v546, 0
  %v656 = vsel %vm206, %v547, 0
  %v659 = vsel %vm206, %v548, 0
  %v662 = vsel %vm206, %v549, 0
  %v665 = vsel %vm206, %v550, 0
  %v668 = vsel %vm206, %v551, 0
  %v671 = vsel %vm206, %v552, 0
  %v674 = vsel %vm206, %v553, 0
  %v677 = vsel %vm206, %v554, 0
  %v680 = vsel %vm206, %v555, 0
  %v683 = vsel %vm206, %v556, 0
  %v686 = vsel %vm206, %v557, 0
  %v689 = vsel %vm206, %v558, 0
  %v692 = vsel %vm206, %v559, 0
  %v695 = vsel %vm206, %v560, 0
  %v698 = vsel %vm206, %v561, 0
  %v701 = vsel %vm206, %v562, 0
  %v704 = vsel %vm206, %v563, 0
  %v707 = vsel %vm206, %v564, 0
  %v710 = vsel %vm206, %v565, 0
  %v713 = vsel %vm206, %v566, 0
  %v716 = vsel %vm206, %v567, 0
  %v719 = vsel %vm206, %v568, 0
  %v722 = vsel %vm206, %v569, 0
  %v725 = vsel %vm206, %v570, 0
  %v728 = vsel %vm206, %v571, 0
  %v731 = vsel %vm206, %v572, 0
  %v734 = vsel %vm206, %v573, 0
  %v737 = vsel %vm206, %v574, 0
  %v740 = vsel %vm206, %v575, 0
  %v743 = vsel %vm206, %v576, 0
  %v746 = vsel %vm206, %v577, 0
  %v749 = vsel %vm206, %v578, 0
  %v752 = vsel %vm206, %v579, 0
  %v755 = vsel %vm206, %v580, 0
  %v758 = vsel %vm206, %v581, 0
  %v761 = vsel %vm206, %v582, 0
  %v764 = vsel %vm206, %v583, 0
  %v767 = vsel %vm206, %v584, 0
  %v770 = vsel %vm206, %v585, 0
  %v773 = vsel %vm206, %v586, 0
  %v776 = vsel %vm206, %v587, 0
  %v779 = vsel %vm206, %v588, 0
  %v782 = vsel %vm206, %v589, 0
  %v785 = vsel %vm206, %v590, 0
  %787 = vmatprep.subr.mxu0 0.0
  %788 = vmatpush1.xpose.msra.mxu0 %v596
  %789 = vmatprep.subr.mxu0 0.0
  %790 = vmatpush1.xpose.msra.mxu0 %v599
  %791 = vmatprep.subr.mxu0 0.0
  %792 = vmatpush1.xpose.msra.mxu0 %v602
  %793 = vmatprep.subr.mxu0 0.0
  %794 = vmatpush1.xpose.msra.mxu0 %v605
  %795 = vmatprep.subr.mxu0 0.0
  %796 = vmatpush1.xpose.msra.mxu0 %v608
  %797 = vmatprep.subr.mxu0 0.0
  %798 = vmatpush1.xpose.msra.mxu0 %v611
  %799 = vmatprep.subr.mxu0 0.0
  %800 = vmatpush1.xpose.msra.mxu0 %v614
  %801 = vmatprep.subr.mxu0 0.0
  %802 = vmatpush1.xpose.msra.mxu0 %v617
  %803 = vmatprep.subr.mxu0 0.0
  %804 = vmatpush1.xpose.msra.mxu0 %v620
  %805 = vmatprep.subr.mxu0 0.0
  %806 = vmatpush1.xpose.msra.mxu0 %v623
  %807 = vmatprep.subr.mxu0 0.0
  %808 = vmatpush1.xpose.msra.mxu0 %v626
  %809 = vmatprep.subr.mxu0 0.0
  %810 = vmatpush1.xpose.msra.mxu0 %v629
  %811 = vmatprep.subr.mxu0 0.0
  %812 = vmatpush1.xpose.msra.mxu0 %v632
  %813 = vmatprep.subr.mxu0 0.0
  %814 = vmatpush1.xpose.msra.mxu0 %v635
  %815 = vmatprep.subr.mxu0 0.0
  %816 = vmatpush1.xpose.msra.mxu0 %v638
  %817 = vmatprep.subr.mxu0 0.0
  %818 = vmatpush1.xpose.msra.mxu0 %v641
  %819 = vmatprep.subr.mxu0 0.0
  %820 = vmatpush1.xpose.msra.mxu0 %v644
  %821 = vmatprep.subr.mxu0 0.0
  %822 = vmatpush1.xpose.msra.mxu0 %v647
  %823 = vmatprep.subr.mxu0 0.0
  %824 = vmatpush1.xpose.msra.mxu0 %v650
  %825 = vmatprep.subr.mxu0 0.0
  %826 = vmatpush1.xpose.msra.mxu0 %v653
  %827 = vmatprep.subr.mxu0 0.0
  %828 = vmatpush1.xpose.msra.mxu0 %v656
  %829 = vmatprep.subr.mxu0 0.0
  %830 = vmatpush1.xpose.msra.mxu0 %v659
  %831 = vmatprep.subr.mxu0 0.0
  %832 = vmatpush1.xpose.msra.mxu0 %v662
  %833 = vmatprep.subr.mxu0 0.0
  %834 = vmatpush1.xpose.msra.mxu0 %v665
  %835 = vmatprep.subr.mxu0 0.0
  %836 = vmatpush1.xpose.msra.mxu0 %v668
  %837 = vmatprep.subr.mxu0 0.0
  %838 = vmatpush1.xpose.msra.mxu0 %v671
  %839 = vmatprep.subr.mxu0 0.0
  %840 = vmatpush1.xpose.msra.mxu0 %v674
  %841 = vmatprep.subr.mxu0 0.0
  %842 = vmatpush1.xpose.msra.mxu0 %v677
  %843 = vmatprep.subr.mxu0 0.0
  %844 = vmatpush1.xpose.msra.mxu0 %v680
  %845 = vmatprep.subr.mxu0 0.0
  %846 = vmatpush1.xpose.msra.mxu0 %v683
  %847 = vmatprep.subr.mxu0 0.0
  %848 = vmatpush1.xpose.msra.mxu0 %v686
  %849 = vmatprep.subr.mxu0 0.0
  %850 = vmatpush1.xpose.msra.mxu0 %v689
  %851 = vmatprep.mubr.f32.mxu0 0.0
  %852 = vmatmul.mubr.f32.gmra.mrb[0].mxu0 %v593
  %v853 = vpop.f32.mrb[0].mxu0
  %v854 = vadd.f32 0.0, %v853
  %v855 = vpop.f32.mrb[0].mxu0
  %v856 = vadd.f32 0.0, %v855
  %857 = vdwg.mxu0
  %858 = vmatprep.subr.mxu0 0.0
  %859 = vmatpush1.xpose.msra.mxu0 %v692
  %860 = vmatprep.subr.mxu0 0.0
  %861 = vmatpush1.xpose.msra.mxu0 %v695
  %862 = vmatprep.subr.mxu0 0.0
  %863 = vmatpush1.xpose.msra.mxu0 %v698
  %864 = vmatprep.subr.mxu0 0.0
  %865 = vmatpush1.xpose.msra.mxu0 %v701
  %866 = vmatprep.subr.mxu0 0.0
  %867 = vmatpush1.xpose.msra.mxu0 %v704
  %868 = vmatprep.subr.mxu0 0.0
  %869 = vmatpush1.xpose.msra.mxu0 %v707
  %870 = vmatprep.subr.mxu0 0.0
  %871 = vmatpush1.xpose.msra.mxu0 %v710
  %872 = vmatprep.subr.mxu0 0.0
  %873 = vmatpush1.xpose.msra.mxu0 %v713
  %874 = vmatprep.subr.mxu0 0.0
  %875 = vmatpush1.xpose.msra.mxu0 %v716
  %876 = vmatprep.subr.mxu0 0.0
  %877 = vmatpush1.xpose.msra.mxu0 %v719
  %878 = vmatprep.subr.mxu0 0.0
  %879 = vmatpush1.xpose.msra.mxu0 %v722
  %880 = vmatprep.subr.mxu0 0.0
  %881 = vmatpush1.xpose.msra.mxu0 %v725
  %882 = vmatprep.subr.mxu0 0.0
  %883 = vmatpush1.xpose.msra.mxu0 %v728
  %884 = vmatprep.subr.mxu0 0.0
  %885 = vmatpush1.xpose.msra.mxu0 %v731
  %886 = vmatprep.subr.mxu0 0.0
  %887 = vmatpush1.xpose.msra.mxu0 %v734
  %888 = vmatprep.subr.mxu0 0.0
  %889 = vmatpush1.xpose.msra.mxu0 %v737
  %890 = vmatprep.subr.mxu0 0.0
  %891 = vmatpush1.xpose.msra.mxu0 %v740
  %892 = vmatprep.subr.mxu0 0.0
  %893 = vmatpush1.xpose.msra.mxu0 %v743
  %894 = vmatprep.subr.mxu0 0.0
  %895 = vmatpush1.xpose.msra.mxu0 %v746
  %896 = vmatprep.subr.mxu0 0.0
  %897 = vmatpush1.xpose.msra.mxu0 %v749
  %898 = vmatprep.subr.mxu0 0.0
  %899 = vmatpush1.xpose.msra.mxu0 %v752
  %900 = vmatprep.subr.mxu0 0.0
  %901 = vmatpush1.xpose.msra.mxu0 %v755
  %902 = vmatprep.subr.mxu0 0.0
  %903 = vmatpush1.xpose.msra.mxu0 %v758
  %904 = vmatprep.subr.mxu0 0.0
  %905 = vmatpush1.xpose.msra.mxu0 %v761
  %906 = vmatprep.subr.mxu0 0.0
  %907 = vmatpush1.xpose.msra.mxu0 %v764
  %908 = vmatprep.subr.mxu0 0.0
  %909 = vmatpush1.xpose.msra.mxu0 %v767
  %910 = vmatprep.subr.mxu0 0.0
  %911 = vmatpush1.xpose.msra.mxu0 %v770
  %912 = vmatprep.subr.mxu0 0.0
  %913 = vmatpush1.xpose.msra.mxu0 %v773
  %914 = vmatprep.subr.mxu0 0.0
  %915 = vmatpush1.xpose.msra.mxu0 %v776
  %916 = vmatprep.subr.mxu0 0.0
  %917 = vmatpush1.xpose.msra.mxu0 %v779
  %918 = vmatprep.subr.mxu0 0.0
  %919 = vmatpush1.xpose.msra.mxu0 %v782
  %920 = vmatprep.subr.mxu0 0.0
  %921 = vmatpush1.xpose.msra.mxu0 %v785
  %922 = vmatprep.mubr.f32.mxu0 0.0
  %923 = vmatmul.mubr.f32.gmra.mrb[0].mxu0 %v593
  %v924 = vpop.f32.mrb[0].mxu0
  %v925 = vadd.f32 0.0, %v924
  %v926 = vpop.f32.mrb[0].mxu0
  %v927 = vadd.f32 0.0, %v926
  %928 = vdwg.mxu0
  %v929 = vmul.f32 %v854, 0.02
  %v930 = vmul.f32 %v856, 0.02
  %v931 = vmul.f32 %v925, 0.02
  %v932 = vmul.f32 %v927, 0.02
  %v933 = vrot.slane %v929, 4
  %v934 = vmax.f32 %v929, %v933
  %v935 = vrot.slane %v934, 2
  %v936 = vmax.f32 %v934, %v935
  %v937 = vrot.slane %v936, 1
  %v938 = vmax.f32 %v936, %v937
  %v939 = vrot.slane %v930, 4
  %v940 = vmax.f32 %v930, %v939
  %v941 = vrot.slane %v940, 2
  %v942 = vmax.f32 %v940, %v941
  %v943 = vrot.slane %v942, 1
  %v944 = vmax.f32 %v942, %v943
  %v945 = vrot.slane %v931, 4
  %v946 = vmax.f32 %v931, %v945
  %v947 = vrot.slane %v946, 2
  %v948 = vmax.f32 %v946, %v947
  %v949 = vrot.slane %v948, 1
  %v950 = vmax.f32 %v948, %v949
  %v951 = vrot.slane %v932, 4
  %v952 = vmax.f32 %v932, %v951
  %v953 = vrot.slane %v952, 2
  %v954 = vmax.f32 %v952, %v953
  %v955 = vrot.slane %v954, 1
  %v956 = vmax.f32 %v954, %v955
  %v957 = vsub.f32 %v929, %v938
  %v958 = vsub.f32 %v930, %v944
  %v959 = vsub.f32 %v931, %v950
  %v960 = vsub.f32 %v932, %v956
  %v961 = vmul.f32 %v957, 1.442695
  %v962 = vpow.pop %v961
  %v963 = vmul.f32 %v958, 1.442695
  %v964 = vpow.pop %v963
  %v965 = vmul.f32 %v959, 1.442695
  %v966 = vpow.pop %v965
  %v967 = vmul.f32 %v960, 1.442695
  %v968 = vpow.pop %v967
  %v969 = vrot.slane %v962, 4
  %v970 = vadd.f32 %v962, %v969
  %v971 = vrot.slane %v970, 2
  %v972 = vadd.f32 %v970, %v971
  %v973 = vrot.slane %v972, 1
  %v974 = vadd.f32 %v972, %v973
  %v975 = vrot.slane %v964, 4
  %v976 = vadd.f32 %v964, %v975
  %v977 = vrot.slane %v976, 2
  %v978 = vadd.f32 %v976, %v977
  %v979 = vrot.slane %v978, 1
  %v980 = vadd.f32 %v978, %v979
  %v981 = vrot.slane %v966, 4
  %v982 = vadd.f32 %v966, %v981
  %v983 = vrot.slane %v982, 2
  %v984 = vadd.f32 %v982, %v983
  %v985 = vrot.slane %v984, 1
  %v986 = vadd.f32 %v984, %v985
  %v987 = vrot.slane %v968, 4
  %v988 = vadd.f32 %v968, %v987
  %v989 = vrot.slane %v988, 2
  %v990 = vadd.f32 %v988, %v989
  %v991 = vrot.slane %v990, 1
  %v992 = vadd.f32 %v990, %v991
  %v993 = vlog2.pop %v974
  %v994 = vmul.f32 %v993, 0.6931472
  %v995 = vlog2.pop %v980
  %v996 = vmul.f32 %v995, 0.6931472
  %v997 = vlog2.pop %v986
  %v998 = vmul.f32 %v997, 0.6931472
  %v999 = vlog2.pop %v992
  %v1000 = vmul.f32 %v999, 0.6931472
  %v1001 = vadd.f32 %v938, %v994
  %v1002 = vadd.f32 %v944, %v996
  %v1003 = vadd.f32 %v950, %v998
  %v1004 = vadd.f32 %v956, %v1000
  %v1005 = vlaneseq
  %v1006 = vshrl.u32 %v1005, 7
  %v1007 = vlaneseq
  %v1008 = vshrl.u32 %v1007, 7
  %v1009 = vsub.s32 0, %v1008
  %v1010 = vrot.slane %v141, %v1009
  %v1011 = vlaneseq
  %v1012 = vshrl.u32 %v1011, 7
  %v1013 = vsub.s32 1, %v1012
  %v1014 = vrot.slane %v141, %v1013
  %v1015 = vlaneseq
  %v1016 = vshrl.u32 %v1015, 7
  %v1017 = vsub.s32 2, %v1016
  %v1018 = vrot.slane %v141, %v1017
  %v1019 = vlaneseq
  %v1020 = vshrl.u32 %v1019, 7
  %v1021 = vsub.s32 3, %v1020
  %v1022 = vrot.slane %v141, %v1021
  %vm1023 = vcmp.eq.s32.totalorder %v1006, %v1010
  %vm1024 = vcmp.eq.s32.totalorder %v1006, %v1014
  %vm1025 = vcmp.eq.s32.totalorder %v1006, %v1018
  %vm1026 = vcmp.eq.s32.totalorder %v1006, %v1022
  %v1027 = vsel %vm1023, 1, 0
  %v1028 = vsel %vm1024, 1, 0
  %v1029 = vsel %vm1025, 1, 0
  %v1030 = vsel %vm1026, 1, 0
  %v1031 = vcvt.s32.f32 %v1027
  %v1032 = vcvt.s32.f32 %v1028
  %v1033 = vcvt.s32.f32 %v1029
  %v1034 = vcvt.s32.f32 %v1030
  %v1035 = vmul.f32 %v929, %v1031
  %v1036 = vmul.f32 %v930, %v1032
  %v1037 = vmul.f32 %v931, %v1033
  %v1038 = vmul.f32 %v932, %v1034
  %v1039 = vrot.slane %v1035, 4
  %v1040 = vadd.f32 %v1035, %v1039
  %v1041 = vrot.slane %v1040, 2
  %v1042 = vadd.f32 %v1040, %v1041
  %v1043 = vrot.slane %v1042, 1
  %v1044 = vadd.f32 %v1042, %v1043
  %v1045 = vrot.slane %v1036, 4
  %v1046 = vadd.f32 %v1036, %v1045
  %v1047 = vrot.slane %v1046, 2
  %v1048 = vadd.f32 %v1046, %v1047
  %v1049 = vrot.slane %v1048, 1
  %v1050 = vadd.f32 %v1048, %v1049
  %v1051 = vrot.slane %v1037, 4
  %v1052 = vadd.f32 %v1037, %v1051
  %v1053 = vrot.slane %v1052, 2
  %v1054 = vadd.f32 %v1052, %v1053
  %v1055 = vrot.slane %v1054, 1
  %v1056 = vadd.f32 %v1054, %v1055
  %v1057 = vrot.slane %v1038, 4
  %v1058 = vadd.f32 %v1038, %v1057
  %v1059 = vrot.slane %v1058, 2
  %v1060 = vadd.f32 %v1058, %v1059
  %v1061 = vrot.slane %v1060, 1
  %v1062 = vadd.f32 %v1060, %v1061
  %vm1063 = vcmp.ne.s32.totalorder %v141, 255
  %v1064 = vsel %vm1063, 1, 0
  %v1065 = vcvt.s32.f32 %v1064
  %v1066 = vsub.f32 %v1001, %v1044
  %v1067 = vsub.f32 %v1002, %v1050
  %v1068 = vsub.f32 %v1003, %v1056
  %v1069 = vsub.f32 %v1004, %v1062
  %v1071 = vlaneseq
  %v1072 = vshrl.u32 %v1071, 7
  %v1073 = vsub.s32 0, %v1072
  %v1074 = vrot.slane %v1065, %v1073
  %v1075 = vlaneseq
  %v1076 = vshrl.u32 %v1075, 7
  %v1077 = vsub.s32 1, %v1076
  %v1078 = vrot.slane %v1065, %v1077
  %v1079 = vlaneseq
  %v1080 = vshrl.u32 %v1079, 7
  %v1081 = vsub.s32 2, %v1080
  %v1082 = vrot.slane %v1065, %v1081
  %v1083 = vlaneseq
  %v1084 = vshrl.u32 %v1083, 7
  %v1085 = vsub.s32 3, %v1084
  %v1086 = vrot.slane %v1065, %v1085
  %v1091 = vmul.f32 %v1066, %v1074
  %v1092 = vmul.f32 %v1067, %v1078
  %v1093 = vmul.f32 %v1068, %v1082
  %v1094 = vmul.f32 %v1069, %v1086
  %v1095 = vld [vmem:[%s3] sm:$0xf]
  %v1100 = vcombine.low %v1091, %v1092
  %v1101 = vcombine.low %v1093, %v1094
  %v1103 = vunpack.c.l.s4 1966171168
  %v1104 = vunpack.c.0.s8 %v1103
  %v1105 = vlaneseq
  %v1106 = vshrl.u32 %v1105, 7
  %v1107 = vsub.s32 %v1104, %v1106
  %v1108 = vrot.slane %v1100, %v1107
  %v1110 = vunpack.c.l.s4 1966171168
  %v1111 = vunpack.c.0.s8 %v1110
  %v1112 = vlaneseq
  %v1113 = vshrl.u32 %v1112, 7
  %v1114 = vsub.s32 %v1111, %v1113
  %v1115 = vrot.slane %v1101, %v1114
  %v1116 = vcombine.low %v1108, %v1115
  %v1118 = vunpack.c.l.s4 1966171168
  %v1119 = vunpack.c.0.s8 %v1118
  %v1120 = vlaneseq
  %v1121 = vshrl.u32 %v1120, 7
  %v1122 = vsub.s32 %v1119, %v1121
  %v1123 = vrot.slane %v1116, %v1122
  %v1125 = vadd.f32 %v1095, %v1123
  %v1126 = vlaneseq
  %vm1127 = vcmp.ge.s32.totalorder %v1126, 0
  %vm1128 = vcmp.lt.s32.totalorder %v1126, 512
  %vm1129 = vmand %vm1127, %vm1128
  %1130 = vst.msk [vmem:[%s3] sm:$0xf] %vm1129, %v1125
  %v1131 = vld [vmem:[%s4] sm:$0xf]
  %v1132 = vadd.f32 %v1131, %v1065
  %1133 = vst.msk [vmem:[%s4] sm:$0xf] %vm1129, %v1132
  // Predicated region
  $region18: #{prototype_contrastive_loss.1} parent=0 // pred_check
    _
  $region19: #{prototype_contrastive_loss.1} parent=0 // pred_check_branch
    %1135 = sbr.rel (0) target = $region21
  $region20: #{prototype_contrastive_loss.1} parent=0 // pred_region
    _
  $region21: #{prototype_contrastive_loss.1} parent=0 // pred_fallthru
    _
  // Predicated region
  $region22: #{prototype_contrastive_loss.1} parent=0 // pred_check
    _
  $region23: #{prototype_contrastive_loss.1} parent=0 // pred_check_branch
    %1137 = sbr.rel (0) target = $region25
  $region24: #{prototype_contrastive_loss.1} parent=0 // pred_region
    _
  $region25: #{prototype_contrastive_loss.1} parent=0 // pred_fallthru
    _
  // Predicated region
  $region26: #{prototype_contrastive_loss.1} parent=0 // pred_check
    _
  $region27: #{prototype_contrastive_loss.1} parent=0 // pred_check_branch
    %1139 = sbr.rel (0) target = $region29
  $region28: #{prototype_contrastive_loss.1} parent=0 // pred_region
    _
  $region29: #{prototype_contrastive_loss.1} parent=0 // pred_fallthru
    _
  // Predicated region
  $region30: #{prototype_contrastive_loss.1} parent=0 // pred_check
    _
  $region31: #{prototype_contrastive_loss.1} parent=0 // pred_check_branch
    %1141 = sbr.rel (0) target = $region33
  $region32: #{prototype_contrastive_loss.1} parent=0 // pred_region
    _
  $region33: #{prototype_contrastive_loss.1} parent=0 // pred_fallthru
    _

</llo_original>
